<compile_context>
chip_gen: v7x
topology: tpu7x:2x2x1
jax: 0.10.0
libtpu: 0.0.40
codegen_flags: <defaults>
</compile_context>

<pallas_src>
import functools

import jax
import jax.numpy as jnp
from jax import lax
from jax.experimental import pallas as pl
from jax.experimental.pallas import tpu as pltpu

LEAKY_SLOPE = 0.01  # PyTorch nn.LeakyReLU default


# --------------------------------------------------------------------------
# Small helpers
# --------------------------------------------------------------------------
def _round_up(x, m):
    return (x + m - 1) // m * m


def _pad_axis(arr, axis, mult):
    pad = (-arr.shape[axis]) % mult
    if pad == 0:
        return arr
    widths = [(0, 0)] * arr.ndim
    widths[axis] = (0, pad)
    return jnp.pad(arr, widths)


_VMEM_LIMIT = None


def _vmem_limit():
    """3/4 of physical VMEM, capped at 96 MiB (48 MiB on v7x, 96 on v5e/v6e)."""
    global _VMEM_LIMIT
    if _VMEM_LIMIT is None:
        try:
            cap = pltpu.get_tpu_info().vmem_capacity_bytes
        except Exception:
            cap = 64 * 1024 * 1024          # conservative fallback (v7x)
        _VMEM_LIMIT = int(min(96 * 1024 * 1024, (cap * 3) // 4))
    return _VMEM_LIMIT


# --------------------------------------------------------------------------
# pltpu.roll direction probe (so conv tap alignment is convention-proof)
# --------------------------------------------------------------------------
_ROLL_SIGN = None


def _probe_roll_direction():
    """Run a tiny kernel once (outside jit) to learn pltpu.roll's direction."""
    global _ROLL_SIGN
    if _ROLL_SIGN is not None:
        return _ROLL_SIGN

    def kern(x_ref, o_ref):
        o_ref[...] = pltpu.roll(x_ref[...], shift=1, axis=0)

    x = jnp.tile(jnp.arange(8, dtype=jnp.float32)[:, None], (1, 128))
    y = pl.pallas_call(
        kern, out_shape=jax.ShapeDtypeStruct((8, 128), jnp.float32))(x)
    # np.roll semantics would put x[7] into row 0.
    _ROLL_SIGN = 1 if float(y[0, 0]) == 7.0 else -1
    return _ROLL_SIGN


def _np_roll(x, shift, axis=0):
    """np.roll semantics regardless of pltpu.roll's rotate direction."""
    size = x.shape[axis]
    s = shift % size
    if s == 0:
        return x
    sign = _ROLL_SIGN if _ROLL_SIGN is not None else 1
    if sign != 1:
        s = size - s
    return pltpu.roll(x, shift=s, axis=axis)


def _leaky(v):
    return jnp.where(v >= 0, v, LEAKY_SLOPE * v)


# --------------------------------------------------------------------------
# Pallas kernels
# --------------------------------------------------------------------------
def _accum_conv_taps(load_slab, w_ref, kh, kw, base_shift, L, acc):
    """Accumulate kh*kw direct-conv taps on the MXU.

    load_slab(dy) -> (L, cin) bf16 row slab (flattened over (oh, wq), wq%8==0).
    Tap (dy, dx) adds roll(slab(dy) @ w_ref[dy*kw+dx], base_shift - dx) to acc
    (the roll aligns the full-width partial; it lives in the XLU slot).
    """
    for dy in range(kh):
        a = load_slab(dy)
        for dx in range(kw):
            p = jnp.dot(a, w_ref[dy * kw + dx],
                        preferred_element_type=jnp.float32)
            sh = base_shift - dx
            if sh != 0:
                p = _np_roll(p, sh, axis=0)
            acc = acc + p
    return acc


def _block_kernel(*refs, n_in, oh, ow, wq):
    """Fused ConvBlock: conv3x3+LReLU -> conv3x3+LReLU, + 1x1 shortcut.

    Inputs (per concat-fused input i):
      x_ref_i : (oh+2, wq, cin_i)  spatially padded bf16 tile (one batch elem)
      w1_ref_i: (9, cin_i, cout)   conv1 tap weights
      w11_ref_i: (cin_i, cout)     1x1 shortcut weights
    Shared:
      w2_ref  : (9, cout, cout)    conv2 tap weights
      b1/b2/b11 : (1, cout) f32 biases
    Scratch:
      mid_ref : (oh+2, wq, cout) bf16  -- conv1 activation, padded, VMEM-only
    """
    xs = refs[0:n_in]
    w1s = refs[n_in:2 * n_in]
    w11s = refs[2 * n_in:3 * n_in]
    w2_ref = refs[3 * n_in]
    b1_ref, b2_ref, b11_ref = refs[3 * n_in + 1:3 * n_in + 4]
    out_ref = refs[3 * n_in + 4]
    mid_ref = refs[3 * n_in + 5]

    cout = w2_ref.shape[-1]
    L = oh * wq
    f32 = jnp.float32

    # conv1 (3x3, pad 1) and the 1x1 shortcut, over every (concat-fused) input
    acc1 = jnp.zeros((L, cout), f32)
    acc_sc = jnp.zeros((L, cout), f32)
    for x_ref, w1_ref, w11_ref in zip(xs, w1s, w11s):
        cin = x_ref.shape[-1]

        def slab(dy, xr=x_ref, ci=cin):
            return xr[dy:dy + oh].reshape(L, ci)

        acc1 = _accum_conv_taps(slab, w1_ref, 3, 3, 0, L, acc1)
        p = jnp.dot(slab(1), w11_ref[...], preferred_element_type=f32)
        acc_sc = acc_sc + _np_roll(p, -1, axis=0)

    act1 = _leaky(acc1 + b1_ref[...])
    # conv1 activation stays in VMEM; zero halo / alignment-garbage columns.
    mid_ref[...] = jnp.zeros(mid_ref.shape, mid_ref.dtype)
    mid_ref[1:oh + 1, 0:ow] = (
        act1.reshape(oh, wq, cout)[:, :ow, :].astype(mid_ref.dtype))

    # conv2 (3x3, pad 1) reading the padded VMEM intermediate (no left halo
    # stored -> base_shift = +1; zero columns make the wrap-around safe).
    def slab2(dy):
        return mid_ref[dy:dy + oh].reshape(L, cout)

    acc2 = _accum_conv_taps(slab2, w2_ref, 3, 3, 1, L,
                            jnp.zeros((L, cout), f32))

    res = _leaky(acc2 + b2_ref[...]) + acc_sc + b11_ref[...]
    res = res.reshape(oh, wq, cout)[:, :ow, :]
    out_ref[...] = res.astype(out_ref.dtype)


def _conv_kernel(x_ref, w_ref, b_ref, out_ref, *, kh, kw, oh, ow, wq,
                 row_pair, act, cout_keep):
    """Single direct conv (used for the 4x4/stride-2 pools and conv10).

    row_pair=True: x_ref is (Hp//2, 2*wq, cin) with even/odd padded rows packed
    side by side (free XLA reshape) so stride-2 row taps need no strided reads.
    """
    cout = w_ref.shape[-1]
    cin = x_ref.shape[-1]
    L = oh * wq

    def slab(dy):
        if row_pair:
            a = x_ref[dy // 2:dy // 2 + oh,
                      (dy % 2) * wq:(dy % 2) * wq + wq, :]
        else:
            a = x_ref[dy:dy + oh]
        return a.reshape(L, cin)

    acc = _accum_conv_taps(slab, w_ref, kh, kw, 0, L,
                           jnp.zeros((L, cout), jnp.float32))
    res = acc + b_ref[...]
    if act == "leaky":
        res = _leaky(res)
    res = res.reshape(oh, wq, cout)[:, :ow, :]
    if cout_keep is not None and cout_keep < cout:
        res = res[:, :, :cout_keep]
    out_ref[...] = res.astype(out_ref.dtype)


def _gemm_kernel(a_ref, w_ref, b_ref, o_ref):
    acc = jnp.dot(a_ref[...], w_ref[...], preferred_element_type=jnp.float32)
    o_ref[...] = (acc + b_ref[...]).astype(o_ref.dtype)


# --------------------------------------------------------------------------
# Pallas call wrappers
# --------------------------------------------------------------------------
def _pad_input_nhwc(x, ow, wq):
    # 1-pixel halo (pad=1) plus right-padding so the W axis is 8-aligned.
    return jnp.pad(x, ((0, 0), (1, 1), (1, wq - ow - 1), (0, 0)))


def conv_block_fused(xs, p, out_dtype=jnp.bfloat16):
    """Whole ConvBlock in one pallas_call; len(xs) > 1 fuses the channel
    concat of the inputs into the contraction (no HBM concatenate)."""
    w1 = p["conv1"]["w"].astype(jnp.bfloat16)      # (3,3,cin_total,cout)
    w2 = p["conv2"]["w"].astype(jnp.bfloat16)      # (3,3,cout,cout)
    w11 = p["conv11"]["w"].astype(jnp.bfloat16)    # (1,1,cin_total,cout)
    cout = w1.shape[-1]
    N, H, W, _ = xs[0].shape
    oh, ow = H, W
    wq = _round_up(ow + 2, 8)
    Hp = oh + 2

    xps, w1s, w11s = [], [], []
    off = 0
    for x in xs:
        ci = x.shape[-1]
        w1_i = w1[:, :, off:off + ci, :].reshape(9, ci, cout)
        w11_i = w11[0, 0, off:off + ci, :]
        off += ci
        xp = _pad_input_nhwc(x.astype(jnp.bfloat16), ow, wq)
        if ci % 8:                                  # entry layers: cin 2/3/4
            xp = _pad_axis(xp, 3, 8)
            w1_i = _pad_axis(w1_i, 1, 8)
            w11_i = _pad_axis(w11_i, 0, 8)
        xps.append(xp)
        w1s.append(w1_i)
        w11s.append(w11_i)
    assert off == w1.shape[2]

    args, in_specs = [], []
    for xp in xps:
        in_specs.append(pl.BlockSpec((None, Hp, wq, xp.shape[-1]),
                                     lambda nb: (nb, 0, 0, 0)))
        args.append(xp)
    for w1_i in w1s:
        in_specs.append(pl.BlockSpec(w1_i.shape, lambda nb: (0, 0, 0)))
        args.append(w1_i)
    for w11_i in w11s:
        in_specs.append(pl.BlockSpec(w11_i.shape, lambda nb: (0, 0)))
        args.append(w11_i)
    w2f = w2.reshape(9, cout, cout)
    in_specs.append(pl.BlockSpec(w2f.shape, lambda nb: (0, 0, 0)))
    args.append(w2f)
    for b in (p["conv1"]["b"], p["conv2"]["b"], p["conv11"]["b"]):
        in_specs.append(pl.BlockSpec((1, cout), lambda nb: (0, 0)))
        args.append(b.reshape(1, cout).astype(jnp.float32))

    out = pl.pallas_call(
        functools.partial(_block_kernel, n_in=len(xs), oh=oh, ow=ow, wq=wq),
        out_shape=jax.ShapeDtypeStruct((N, oh, ow, cout), out_dtype),
        grid_spec=pltpu.PrefetchScalarGridSpec(
            num_scalar_prefetch=0,
            grid=(N,),
            in_specs=in_specs,
            out_specs=pl.BlockSpec((None, oh, ow, cout),
                                   lambda nb: (nb, 0, 0, 0)),
            scratch_shapes=[pltpu.VMEM((Hp, wq, cout), jnp.bfloat16)]),
        compiler_params=pltpu.CompilerParams(
            dimension_semantics=("parallel",),
            vmem_limit_bytes=_vmem_limit()),
    )(*args)
    return out


def conv_block(p, xs):
    if not isinstance(xs, (list, tuple)):
        xs = [xs]
    return conv_block_fused(list(xs), p)


def conv_pool(x, p, out_dtype=jnp.bfloat16):
    """nn.Conv2d(C, cout, 4, stride=2, padding=1): fold W pairs into channels
    and even/odd rows side-by-side with free reshapes -> 4x3-tap direct conv
    (no HBM space-to-depth, no strided reads)."""
    w = p["w"].astype(jnp.bfloat16)                 # (4,4,C,cout)
    b = p["b"].astype(jnp.float32)
    N, H, W, C = x.shape
    cout = w.shape[-1]
    oh, ow = H // 2, W // 2
    wq = _round_up(ow + 2, 8)
    Hp = H + 2

    xf = x.astype(jnp.bfloat16).reshape(N, H, ow, 2 * C)         # free
    xp = jnp.pad(xf, ((0, 0), (1, 1), (1, wq - ow - 1), (0, 0)))
    xp = xp.reshape(N, Hp // 2, 2 * wq, 2 * C)                   # free

    # fold the 4 dx taps into 3 taps over W pairs (zero halves handle edges)
    z = jnp.zeros_like(w[:, 0])                                  # (4, C, cout)
    wf = jnp.stack([jnp.concatenate([z, w[:, 0]], axis=1),
                    jnp.concatenate([w[:, 1], w[:, 2]], axis=1),
                    jnp.concatenate([w[:, 3], z], axis=1)],
                   axis=1).reshape(12, 2 * C, cout)

    out = pl.pallas_call(
        functools.partial(_conv_kernel, kh=4, kw=3, oh=oh, ow=ow, wq=wq,
                          row_pair=True, act="none", cout_keep=None),
        out_shape=jax.ShapeDtypeStruct((N, oh, ow, cout), out_dtype),
        grid_spec=pltpu.PrefetchScalarGridSpec(
            num_scalar_prefetch=0,
            grid=(N,),
            in_specs=[pl.BlockSpec((None, Hp // 2, 2 * wq, 2 * C),
                                   lambda nb: (nb, 0, 0, 0)),
                      pl.BlockSpec(wf.shape, lambda nb: (0, 0, 0)),
                      pl.BlockSpec((1, cout), lambda nb: (0, 0))],
            out_specs=pl.BlockSpec((None, oh, ow, cout),
                                   lambda nb: (nb, 0, 0, 0))),
        compiler_params=pltpu.CompilerParams(
            dimension_semantics=("parallel",),
            vmem_limit_bytes=_vmem_limit()),
    )(xp, wf, b.reshape(1, cout))
    return out


def conv3x3_plain(x, p, out_dtype=jnp.float32, cout_pad=128):
    """Plain nn.Conv2d(cin, cout, 3, stride=1, padding=1) (final conv10)."""
    w = p["w"].astype(jnp.bfloat16)
    b = p["b"].astype(jnp.float32)
    _, _, cin, cout = w.shape
    N, H, W, _ = x.shape
    oh, ow = H, W
    wq = _round_up(ow + 2, 8)
    Hp = oh + 2

    xp = _pad_input_nhwc(x.astype(jnp.bfloat16), ow, wq)
    wf = w.reshape(9, cin, cout)
    if cin % 8:
        xp = _pad_axis(xp, 3, 8)
        wf = _pad_axis(wf, 1, 8)
    ce = cout_pad if cout < cout_pad else cout      # MXU-friendly N dim
    if ce != cout:
        wf = jnp.pad(wf, ((0, 0), (0, 0), (0, ce - cout)))
        bp = jnp.pad(b, (0, ce - cout))
        cout_keep = cout
    else:
        bp = b
        cout_keep = None

    out = pl.pallas_call(
        functools.partial(_conv_kernel, kh=3, kw=3, oh=oh, ow=ow, wq=wq,
                          row_pair=False, act="none", cout_keep=cout_keep),
        out_shape=jax.ShapeDtypeStruct((N, oh, ow, cout), out_dtype),
        grid_spec=pltpu.PrefetchScalarGridSpec(
            num_scalar_prefetch=0,
            grid=(N,),
            in_specs=[pl.BlockSpec((None, Hp, wq, xp.shape[-1]),
                                   lambda nb: (nb, 0, 0, 0)),
                      pl.BlockSpec(wf.shape, lambda nb: (0, 0, 0)),
                      pl.BlockSpec((1, ce), lambda nb: (0, 0))],
            out_specs=pl.BlockSpec((None, oh, ow, cout),
                                   lambda nb: (nb, 0, 0, 0))),
        compiler_params=pltpu.CompilerParams(
            dimension_semantics=("parallel",),
            vmem_limit_bytes=_vmem_limit()),
    )(xp, wf, bp.reshape(1, ce))
    return out


def gemm_bias(a, w, b, out_dtype=jnp.bfloat16):
    """(M,K)@(K,N)+bias on the MXU.  Whole K per block; TM multiple of 16."""
    M, K = a.shape
    Nc = w.shape[1]
    if K % 8:
        a = _pad_axis(a, 1, 8)
        w = _pad_axis(w, 0, 8)
        K = a.shape[1]
    if Nc % 256 == 0:
        TN = 256
    elif Nc % 128 == 0:
        TN = 128
    else:
        TN = Nc
    TM = min(512, _round_up(M, 16))
    Mp = _round_up(M, TM)
    if Mp != M:
        a = jnp.pad(a, ((0, Mp - M), (0, 0)))

    out = pl.pallas_call(
        _gemm_kernel,
        out_shape=jax.ShapeDtypeStruct((Mp, Nc), out_dtype),
        grid_spec=pltpu.PrefetchScalarGridSpec(
            num_scalar_prefetch=0,
            grid=(Mp // TM, Nc // TN),
            in_specs=[pl.BlockSpec((TM, K), lambda i, j: (i, 0)),
                      pl.BlockSpec((K, TN), lambda i, j: (0, j)),
                      pl.BlockSpec((1, TN), lambda i, j: (0, j))],
            out_specs=pl.BlockSpec((TM, TN), lambda i, j: (i, j))),
        compiler_params=pltpu.CompilerParams(
            dimension_semantics=("parallel", "parallel"),
            vmem_limit_bytes=_vmem_limit()),
    )(a, w, b.reshape(1, Nc).astype(jnp.float32))
    return out[:M] if Mp != M else out


def conv_transpose2x2(x, p, out_dtype=jnp.bfloat16):
    """nn.ConvTranspose2d(cin, cout, 2, stride=2). p["w"]: (cin, cout, 2, 2)."""
    w = p["w"].astype(jnp.bfloat16)
    b = p["b"].astype(jnp.float32)
    cin, cout = w.shape[0], w.shape[1]
    N, H, W, _ = x.shape
    y = gemm_bias(x.reshape(N * H * W, cin), w.reshape(cin, cout * 4),
                  jnp.repeat(b, 4), out_dtype=out_dtype)
    y = y.reshape(N, H, W, cout, 2, 2)
    # TODO(synk): pixel-shuffle is one extra XLA pass; could be folded into the
    # consumer block's taps together with the concat fusion.
    y = jnp.transpose(y, (0, 1, 4, 2, 5, 3)).reshape(N, 2 * H, 2 * W, cout)
    return y


# --------------------------------------------------------------------------
# Module forward (Encoders / UNet)
# --------------------------------------------------------------------------
def encoder_fwd(p, x):
    c1 = conv_block(p["cb1"], x)
    c2 = conv_block(p["cb2"], conv_pool(c1, p["pool1"]))
    c3 = conv_block(p["cb3"], conv_pool(c2, p["pool2"]))
    c4 = conv_block(p["cb4"], conv_pool(c3, p["pool3"]))
    return conv_pool(c4, p["pool4"])


def _attention_rearrange(am_nhwc, Hc, Wc):
    # 'b (c1 c2) h w -> b c1 (c2 h w)' with c1=3, then 'b c (h w) -> b c h w'
    b, ah, aw, ac = am_nhwc.shape
    assert ac % 3 == 0 and (ac // 3) * ah * aw == Hc * Wc, (
        "attention rearrange needs (C/3)*h*w == Hc*Wc (training-res constraint)")
    am = jnp.transpose(am_nhwc, (0, 3, 1, 2)).reshape(b, 3, Hc, Wc)
    return jnp.transpose(am, (0, 2, 3, 1))


def condition_unet_forward(params, x, condition, attention):
    # NCHW in / NCHW out (PyTorch convention); internal compute is NHWC/bf16.
    x = jnp.transpose(x, (0, 2, 3, 1)).astype(jnp.bfloat16)
    condition = jnp.transpose(condition, (0, 2, 3, 1)).astype(jnp.bfloat16)
    attention = jnp.transpose(attention, (0, 2, 3, 1)).astype(jnp.bfloat16)

    # attention branch + gating (plain XLA elementwise; it fuses)
    am = encoder_fwd(params["attn_enc"], attention)
    am = _attention_rearrange(am, condition.shape[1], condition.shape[2])
    condition = (condition * am).astype(jnp.bfloat16)

    cond_feat = encoder_fwd(params["cond_enc"], condition)

    conv1 = conv_block(params["cb1"], x)
    pool1 = conv_pool(conv1, params["pool1"])
    conv2 = conv_block(params["cb2"], pool1)
    pool2 = conv_pool(conv2, params["pool2"])
    conv3 = conv_block(params["cb3"], pool2)
    pool3 = conv_pool(conv3, params["pool3"])
    conv4 = conv_block(params["cb4"], pool3)
    pool4 = conv_pool(conv4, params["pool4"])

    conv5 = conv_block(params["cb5"], [pool4, cond_feat])     # fused concat

    up6 = conv_transpose2x2(conv5, params["up6"])
    conv6 = conv_block(params["cb6"], [up6, conv4])
    up7 = conv_transpose2x2(conv6, params["up7"])
    conv7 = conv_block(params["cb7"], [up7, conv3])
    up8 = conv_transpose2x2(conv7, params["up8"])
    conv8 = conv_block(params["cb8"], [up8, conv2])
    up9 = conv_transpose2x2(conv8, params["up9"])
    conv9 = conv_block(params["cb9"], [up9, conv1])

    out = conv3x3_plain(conv9, params["conv10"], out_dtype=jnp.float32)
    return jnp.transpose(out, (0, 3, 1, 2))                   # (b, 1, H, W)


# --------------------------------------------------------------------------
# Pure-JAX reference (lax.conv) with matching bf16 rounding points
# --------------------------------------------------------------------------
def _q(t):
    return t.astype(jnp.bfloat16).astype(jnp.float32)


def _ref_conv(x, p, stride=1, pad=1):
    w = p["w"].astype(jnp.float32)
    y = lax.conv_general_dilated(x.astype(jnp.float32), w, (stride, stride),
                                 [(pad, pad), (pad, pad)],
                                 dimension_numbers=("NHWC", "HWIO", "NHWC"))
    return y + p["b"].astype(jnp.float32)


def _ref_block(p, x):
    h = _q(_leaky(_ref_conv(x, p["conv1"])))
    h = _leaky(_ref_conv(h, p["conv2"]))
    s = _ref_conv(x, p["conv11"], pad=0)
    return _q(h + s)


def _ref_pool(p, x):
    return _q(_ref_conv(x, p, stride=2, pad=1))


def _ref_convT(p, x):
    w = p["w"].astype(jnp.float32)                 # (cin, cout, 2, 2)
    N, H, W, _ = x.shape
    y = jnp.einsum("nhwc,coyx->nhywxo", x.astype(jnp.float32), w)
    y = y.reshape(N, 2 * H, 2 * W, w.shape[1]) + p["b"].astype(jnp.float32)
    return _q(y)


def _ref_encoder(p, x):
    c1 = _ref_block(p["cb1"], x)
    c2 = _ref_block(p["cb2"], _ref_pool(p["pool1"], c1))
    c3 = _ref_block(p["cb3"], _ref_pool(p["pool2"], c2))
    c4 = _ref_block(p["cb4"], _ref_pool(p["pool3"], c3))
    return _ref_pool(p["pool4"], c4)


def _ref_forward(params, x, condition, attention):
    x = _q(jnp.transpose(x, (0, 2, 3, 1)))
    condition = _q(jnp.transpose(condition, (0, 2, 3, 1)))
    attention = _q(jnp.transpose(attention, (0, 2, 3, 1)))

    am = _ref_encoder(params["attn_enc"], attention)
    am = _attention_rearrange(am, condition.shape[1], condition.shape[2])
    condition = _q(condition * am)
    cond_feat = _ref_encoder(params["cond_enc"], condition)

    c1 = _ref_block(params["cb1"], x)
    p1 = _ref_pool(params["pool1"], c1)
    c2 = _ref_block(params["cb2"], p1)
    p2 = _ref_pool(params["pool2"], c2)
    c3 = _ref_block(params["cb3"], p2)
    p3 = _ref_pool(params["pool3"], c3)
    c4 = _ref_block(params["cb4"], p3)
    p4 = _ref_pool(params["pool4"], c4)

    c5 = _ref_block(params["cb5"], jnp.concatenate([p4, cond_feat], -1))
    u6 = _ref_convT(params["up6"], c5)
    c6 = _ref_block(params["cb6"], jnp.concatenate([u6, c4], -1))
    u7 = _ref_convT(params["up7"], c6)
    c7 = _ref_block(params["cb7"], jnp.concatenate([u7, c3], -1))
    u8 = _ref_convT(params["up8"], c7)
    c8 = _ref_block(params["cb8"], jnp.concatenate([u8, c2], -1))
    u9 = _ref_convT(params["up9"], c8)
    c9 = _ref_block(params["cb9"], jnp.concatenate([u9, c1], -1))
    out = _ref_conv(c9, params["conv10"], stride=1, pad=1)
    return jnp.transpose(out, (0, 3, 1, 2))


# --------------------------------------------------------------------------
# Deterministic parameter initialization (shapes from module __init__)
# --------------------------------------------------------------------------
class _Keys:
    def __init__(self, key):
        self.key = key

    def __call__(self):
        self.key, sub = jax.random.split(self.key)
        return sub


def init_conv(key, cin, cout, k):
    kw_, kb = jax.random.split(key)
    fan_in = cin * k * k
    w = (jax.random.normal(kw_, (k, k, cin, cout), jnp.float32)
         / (fan_in ** 0.5)).astype(jnp.bfloat16)
    b = jax.random.normal(kb, (cout,), jnp.float32) * 0.01
    return {"w": w, "b": b}


def init_convT(key, cin, cout):
    kw_, kb = jax.random.split(key)
    w = (jax.random.normal(kw_, (cin, cout, 2, 2), jnp.float32)
         / ((cin * 4) ** 0.5)).astype(jnp.bfloat16)
    b = jax.random.normal(kb, (cout,), jnp.float32) * 0.01
    return {"w": w, "b": b}


def init_conv_block(kg, cin, cout):
    return {"conv1": init_conv(kg(), cin, cout, 3),
            "conv2": init_conv(kg(), cout, cout, 3),
            "conv11": init_conv(kg(), cin, cout, 1)}


def init_encoder(kg, in_ch, dim, last_out):
    return {"cb1": init_conv_block(kg, in_ch, dim),
            "pool1": init_conv(kg(), dim, dim, 4),
            "cb2": init_conv_block(kg, dim, dim * 2),
            "pool2": init_conv(kg(), dim * 2, dim * 2, 4),
            "cb3": init_conv_block(kg, dim * 2, dim * 4),
            "pool3": init_conv(kg(), dim * 4, dim * 4, 4),
            "cb4": init_conv_block(kg, dim * 4, dim * 8),
            "pool4": init_conv(kg(), dim * 8, last_out, 4)}


def init_condition_unet(key, dim=32):
    kg = _Keys(key)
    return {
        "cond_enc": init_encoder(kg, 3, dim, dim * 8),
        "attn_enc": init_encoder(kg, 4, dim, dim * 24),
        "cb1": init_conv_block(kg, 2, dim),
        "pool1": init_conv(kg(), dim, dim, 4),
        "cb2": init_conv_block(kg, dim, dim * 2),
        "pool2": init_conv(kg(), dim * 2, dim * 2, 4),
        "cb3": init_conv_block(kg, dim * 2, dim * 4),
        "pool3": init_conv(kg(), dim * 4, dim * 4, 4),
        "cb4": init_conv_block(kg, dim * 4, dim * 8),
        "pool4": init_conv(kg(), dim * 8, dim * 8, 4),
        "cb5": init_conv_block(kg, dim * 16, dim * 16),
        "up6": init_convT(kg(), dim * 16, dim * 8),
        "cb6": init_conv_block(kg, dim * 16, dim * 8),
        "up7": init_convT(kg(), dim * 8, dim * 4),
        "cb7": init_conv_block(kg, dim * 8, dim * 4),
        "up8": init_convT(kg(), dim * 4, dim * 2),
        "cb8": init_conv_block(kg, dim * 4, dim * 2),
        "up9": init_convT(kg(), dim * 2, dim),
        "cb9": init_conv_block(kg, dim * 2, dim),
        "conv10": init_conv(kg(), dim, 1, 3),
    }


# --------------------------------------------------------------------------
if __name__ == "__main__":
    key = jax.random.PRNGKey(0)
    kx, kc, ka, kp = jax.random.split(key, 4)

    # small shapes: batch=2, spatial=32 (divisible by 16 so all 4 pooling
    # stages work), dim=32 as in the module default.
    B, H, W = 2, 32, 32
    x = jax.random.normal(kx, (B, 2, H, W), jnp.float32)          # UNet input
    condition = jax.random.normal(kc, (B, 3, H, W), jnp.float32)  # condition
    attention = jax.random.normal(ka, (B, 4, H, W), jnp.float32)  # attention

    params = init_condition_unet(kp, dim=32)

    _probe_roll_direction()   # resolve pltpu.roll rotate direction once

    fwd = jax.jit(condition_unet_forward)
    out = fwd(params, x, condition, attention)
    jax.block_until_ready(out)

    assert out.shape == (B, 1, H, W), out.shape
    assert out.dtype == jnp.float32
    assert bool(jnp.all(jnp.isfinite(out)))

    # numerical check vs a pure-JAX (lax.conv) reference with matching bf16
    # rounding points; catches tap-alignment / weight-split / roll-direction
    # bugs with a wide margin over bf16 accumulation noise.
    ref = jax.jit(_ref_forward)(params, x, condition, attention)
    rel = float(jnp.linalg.norm((out - ref).astype(jnp.float32)) /
                (jnp.linalg.norm(ref.astype(jnp.float32)) + 1e-12))
    assert rel < 0.1, f"relative error vs reference too large: {rel}"

    print("KERNEL_OK")
</pallas_src>

<mosaic_0001>
module attributes {stable_mosaic.version = 11 : i64} {
  func.func @kern(%arg0: memref<8x128xf32, #tpu.memory_space<vmem>>, %arg1: memref<8x128xf32, #tpu.memory_space<vmem>>) attributes {dimension_semantics = [], scalar_prefetch = 0 : i64, scratch_operands = 0 : i64, tpu.core_type = #tpu.core_type<tc>} {
    %c0 = arith.constant 0 : index
    %c0_0 = arith.constant 0 : index
    %0 = vector.load %arg0[%c0, %c0_0] : memref<8x128xf32, #tpu.memory_space<vmem>>, vector<8x128xf32>
    %c1_i32 = arith.constant 1 : i32
    %1 = tpu.dynamic_rotate %0 by %c1_i32 dim 0 : vector<8x128xf32>, i32 -> vector<8x128xf32>
    %c0_1 = arith.constant 0 : index
    %c0_2 = arith.constant 0 : index
    %2 = vector.load %arg1[%c0_1, %c0_2] : memref<8x128xf32, #tpu.memory_space<vmem>>, vector<8x128xf32>
    tpu.vector_store %arg1[%c0_1, %c0_2], %1 {strides = array<i32>} : memref<8x128xf32, #tpu.memory_space<vmem>>, vector<8x128xf32>,
    return
  }
}

</mosaic_0001>

<llo_original>
// kernel: tpu_custom_call.1
$region0: #{tpu_custom_call.1}
  #allocation0 [shape = 'u32[]', space=smem, size = 0x4, offset = 0x4, fixed_abs, tag = 'smem constant byte address 0x4 - core index']
  #allocation1 [shape = 'u32[144,128]{1,0:T(1,128)}', space=vmem, size = 0x12000, scoped, tag = 'internal scratch']
  %s0 = inlined_call_operand.hbm [shape: f32[8,128], index: 0, kind: input, shape index: {}]
  %s1 = inlined_call_operand.hbm [shape: f32[8,128], index: 1, kind: output, shape index: {}]
  %s2 = sld [smem:[#allocation0]]
  $region18: #{tpu_custom_call.1} parent=0
    _
  %s4 = ssub.s32 1, %s2
  %s5 = scalar_select 0, %s4, %s2
  $region1: #{tpu_custom_call.1} parent=0
    #allocation2 [shape = 'u8[4096]{0}', space=vmem, size = 0x1000, scoped, tag = 'input window, operand 0, single buffered']
    #allocation3 [shape = 's32[1]{0}', space=sflag, size = 0x4, scoped, tag = 'scoped memory for tpu_custom_call.1']
    #allocation4 [shape = 's32[1]{0}', space=sflag, size = 0x4, scoped, tag = 'scoped memory for tpu_custom_call.1']
    #allocation5 [shape = 'u8[4096]{0}', space=vmem, size = 0x1000, scoped, tag = 'output window, operand 0, single buffered']
    %6 = vsyncpa [#allocation3], 0
    %7 = vsyncpa [#allocation4], 0
    // Predicated region
    $region2: #{tpu_custom_call.1} parent=1 // pred_check
      _
    $region3: #{tpu_custom_call.1} parent=1 // pred_check_branch
      %9 = sbr.rel (0) target = $region5
    $region4: #{tpu_custom_call.1} parent=1 // pred_region
      %s11 = ssub.s32 128, 128
      %12 = vsyncadd [#allocation3], %s11
      %s14 = sshll.u32 [#allocation2], 4
      %s15 = int_to_ptr.vmem [resolvable:$true] %s14
      %17 = dma.hbm_to_vmem [thread:$0]  %s0, 128, %s15, [#allocation3]
    $region5: #{tpu_custom_call.1} parent=1 // pred_fallthru
      _
    // Predicated region
    $region6: #{tpu_custom_call.1} parent=1 // pred_check
      _
    $region7: #{tpu_custom_call.1} parent=1 // pred_check_branch
      %19 = sbr.rel (0) target = $region9
    $region8: #{tpu_custom_call.1} parent=1 // pred_region
      %20 = dma.done [#allocation3], 128
    $region9: #{tpu_custom_call.1} parent=1 // pred_fallthru
      _
    %v21 = vld [vmem:[#allocation2] sm:$0xff]
    %v22 = vrot.slane %v21, 7
    %23 = vst [vmem:[#allocation5] sm:$0xff] %v22
    // Predicated region
    $region10: #{tpu_custom_call.1} parent=1 // pred_check
      _
    $region11: #{tpu_custom_call.1} parent=1 // pred_check_branch
      %25 = sbr.rel (0) target = $region13
    $region12: #{tpu_custom_call.1} parent=1 // pred_region
      %s27 = ssub.s32 128, 128
      %28 = vsyncadd [#allocation4], %s27
      %s30 = sshll.u32 [#allocation5], 4
      %s31 = int_to_ptr.vmem [resolvable:$true] %s30
      %33 = dma.vmem_to_hbm [thread:$0]  %s31, 128, %s1, [#allocation4]
    $region13: #{tpu_custom_call.1} parent=1 // pred_fallthru
      _
    // Predicated region
    $region14: #{tpu_custom_call.1} parent=1 // pred_check
      _
    $region15: #{tpu_custom_call.1} parent=1 // pred_check_branch
      %35 = sbr.rel (0) target = $region17
    $region16: #{tpu_custom_call.1} parent=1 // pred_region
      %36 = dma.done [#allocation4], 128
    $region17: #{tpu_custom_call.1} parent=1 // pred_fallthru
      _
    %37 = vsyncpa [#allocation3], 1
    %38 = vsyncpa [#allocation4], 1

</llo_original>
